<compile_context>
chip_gen: v5e
topology: v5e:2x2
jax: 0.10.0
libtpu: 0.0.40
codegen_flags: <defaults>
</compile_context>

<pallas_src>
import functools

import jax
import jax.numpy as jnp
from jax.experimental import pallas as pl
from jax.experimental.pallas import tpu as pltpu


def _round_up(n, m):
    return (n + m - 1) // m * m


# ---------------------------------------------------------------------------
# Kernel: (optional ReLU) -> two independent K=vdim matmuls from x
# ---------------------------------------------------------------------------
def _cell_kernel(x_ref, w_enc_ref, b_enc_ref, w_all_ref, b_all_ref,
                 ench_ref, dech_ref, *, apply_relu):
    x = x_ref[...]
    if apply_relu:                      # test_encoder path: ReLU before the Linear
        x = jnp.maximum(x, 0.0)

    # ench = x @ W_enc + b_enc            (TB, vdim) @ (vdim, encdim)
    ench = jnp.dot(x, w_enc_ref[...],
                   preferred_element_type=jnp.float32) + b_enc_ref[...]
    # dech = x @ W_all + b_all            (TB, vdim) @ (vdim, out_p)
    # (encoder + both decoder Linears folded offline; no serial dependency)
    dech = jnp.dot(x, w_all_ref[...],
                   preferred_element_type=jnp.float32) + b_all_ref[...]

    ench_ref[...] = ench.astype(ench_ref.dtype)
    dech_ref[...] = dech.astype(dech_ref.dtype)


# ---------------------------------------------------------------------------
# Parameter preparation: full linear-chain fold (+ lane padding for dech only)
# ---------------------------------------------------------------------------
def prepare_params(params, compute_dtype=jnp.float32, output_dtype=jnp.float32):
    vdim, encdim = params["train_enc_w"].shape
    out_ctx = params["dec2_w"].shape[1]
    out_p = _round_up(out_ctx, 128)

    # Fold decoder[0] @ decoder[1] (exact modulo fp summation order).
    w_dec = params["dec1_w"] @ params["dec2_w"]                       # (encdim, out_ctx)
    b_dec = params["dec1_b"] @ params["dec2_w"] + params["dec2_b"]    # (1, out_ctx)

    pad_c = lambda a, n: jnp.pad(a, ((0, 0), (0, n - a.shape[1])))

    def enc_and_full_fold(w_enc, b_enc):
        w_all = w_enc @ w_dec                 # (vdim, out_ctx)
        b_all = b_enc @ w_dec + b_dec         # (1, out_ctx)
        return (w_enc.astype(compute_dtype),
                b_enc.astype(jnp.float32),
                pad_c(w_all, out_p).astype(compute_dtype),
                pad_c(b_all, out_p).astype(jnp.float32))

    tr_w, tr_b, tr_all_w, tr_all_b = enc_and_full_fold(
        params["train_enc_w"], params["train_enc_b"])
    te_w, te_b, te_all_w, te_all_b = enc_and_full_fold(
        params["test_enc_w"], params["test_enc_b"])

    return {
        "vdim": vdim, "encdim": encdim, "out_ctx": out_ctx, "out_p": out_p,
        "compute_dtype": compute_dtype, "output_dtype": output_dtype,
        "train_enc_w": tr_w, "train_enc_b": tr_b,
        "train_all_w": tr_all_w, "train_all_b": tr_all_b,
        "test_enc_w": te_w, "test_enc_b": te_b,
        "test_all_w": te_all_w, "test_all_b": te_all_b,
    }


# ---------------------------------------------------------------------------
# Forward wrapper
# ---------------------------------------------------------------------------
def table_cell_forward(target_vecs, doc_ids, prep, train=True, block_b=4096):
    """target_vecs: (B, 1, vdim). doc_ids is unused (matches the PyTorch forward)."""
    del doc_ids
    B = target_vecs.shape[0]
    vdim, encdim = prep["vdim"], prep["encdim"]
    out_ctx, out_p = prep["out_ctx"], prep["out_p"]
    cdt, odt = prep["compute_dtype"], prep["output_dtype"]

    x = target_vecs.reshape(B, vdim).astype(cdt)

    if train:
        w_enc, b_enc = prep["train_enc_w"], prep["train_enc_b"]
        w_all, b_all = prep["train_all_w"], prep["train_all_b"]
        apply_relu = False
    else:
        w_enc, b_enc = prep["test_enc_w"], prep["test_enc_b"]
        w_all, b_all = prep["test_all_w"], prep["test_all_b"]
        apply_relu = True

    # Batch tiling: tb multiple of 8 sublanes; target an even, >=2-step grid when
    # the batch is big enough so v7x's 2 TensorCores both get work (the extra
    # step is negligible on single-TC v5e/v6e).
    steps = pl.cdiv(B, block_b)
    if B >= 16:
        steps = max(steps, 2)
    if steps > 1 and steps % 2:
        steps += 1
    tb = min(_round_up(pl.cdiv(B, steps), 8), _round_up(block_b, 8))
    Bp = _round_up(B, tb)
    if Bp != B:
        x = jnp.pad(x, ((0, Bp - B), (0, 0)))
    grid = (Bp // tb,)

    kernel = functools.partial(_cell_kernel, apply_relu=apply_relu)

    in_sz = jnp.dtype(cdt).itemsize
    out_sz = jnp.dtype(odt).itemsize
    weight_bytes = (w_enc.size * w_enc.dtype.itemsize + b_enc.size * 4
                    + w_all.size * w_all.dtype.itemsize + b_all.size * 4)
    flops = 2 * Bp * vdim * (encdim + out_p)
    bytes_accessed = (Bp * vdim * in_sz + weight_bytes
                      + Bp * encdim * out_sz + Bp * out_p * out_sz)

    # Explicit VMEM budget: double-buffered x / ench / dech blocks + resident
    # weights + slack; clamped well below v7x's 64 MiB/TC and above v5e's
    # 16 MiB default scoped limit so big tiles pipeline cleanly everywhere.
    step_bytes = tb * (vdim * in_sz + encdim * out_sz + out_p * out_sz)
    vmem_limit = int(min(max(2 * step_bytes + weight_bytes + (4 << 20), 32 << 20),
                         48 << 20))

    ench_full, dech_p = pl.pallas_call(
        kernel,
        out_shape=(jax.ShapeDtypeStruct((Bp, encdim), odt),   # natural width, no zero lanes
                   jax.ShapeDtypeStruct((Bp, out_p), odt)),   # lane-dense (mult. of 128)
        grid=grid,
        in_specs=[
            pl.BlockSpec((tb, vdim), lambda i: (i, 0)),       # x      (streamed)
            pl.BlockSpec((vdim, encdim), lambda i: (0, 0)),   # w_enc  (resident)
            pl.BlockSpec((1, encdim), lambda i: (0, 0)),      # b_enc  (resident)
            pl.BlockSpec((vdim, out_p), lambda i: (0, 0)),    # w_all  (resident)
            pl.BlockSpec((1, out_p), lambda i: (0, 0)),       # b_all  (resident)
        ],
        out_specs=(
            pl.BlockSpec((tb, encdim), lambda i: (i, 0)),     # ench (streamed)
            pl.BlockSpec((tb, out_p), lambda i: (i, 0)),      # dech (streamed)
        ),
        compiler_params=pltpu.CompilerParams(
            dimension_semantics=("parallel",),
            vmem_limit_bytes=vmem_limit),
        cost_estimate=pl.CostEstimate(
            flops=flops, transcendentals=0, bytes_accessed=bytes_accessed),
    )(x, w_enc, b_enc, w_all, b_all)

    ench = ench_full[:B]
    dech = dech_p[:B, :out_ctx]

    # torch .squeeze() removes all size-1 dims; the size-1 middle dim of the
    # original (B, 1, *) input was already removed by the reshape.  (Note: this
    # also drops the batch dim when B == 1, matching torch semantics.)
    return jnp.squeeze(dech), jnp.squeeze(ench)


# ---------------------------------------------------------------------------
# Deterministic synthetic parameters (weights stored transposed: (fin, fout))
# ---------------------------------------------------------------------------
def init_params(key, vdim, encdim, num_context):
    ks = jax.random.split(key, 8)

    def lin(kw, kb, fin, fout):
        scale = 1.0 / jnp.sqrt(fin)
        w = jax.random.uniform(kw, (fin, fout), jnp.float32, -scale, scale)
        b = jax.random.uniform(kb, (1, fout), jnp.float32, -scale, scale)
        return w, b

    train_w, train_b = lin(ks[0], ks[1], vdim, encdim)        # train_encoder Linear
    test_w, test_b = lin(ks[2], ks[3], vdim, encdim)          # test_encoder Linear
    d1_w, d1_b = lin(ks[4], ks[5], encdim, vdim)              # decoder[0]
    d2_w, d2_b = lin(ks[6], ks[7], vdim, vdim * num_context)  # decoder[1]
    return {
        "train_enc_w": train_w, "train_enc_b": train_b,
        "test_enc_w": test_w, "test_enc_b": test_b,
        "dec1_w": d1_w, "dec1_b": d1_b,
        "dec2_w": d2_w, "dec2_b": d2_b,
    }


def _reference(target_vecs, params, train):
    x = target_vecs.reshape(target_vecs.shape[0], -1)
    if train:
        ench = x @ params["train_enc_w"] + params["train_enc_b"]
    else:
        ench = jnp.maximum(x, 0.0) @ params["test_enc_w"] + params["test_enc_b"]
    h = ench @ params["dec1_w"] + params["dec1_b"]
    dech = h @ params["dec2_w"] + params["dec2_b"]
    return jnp.squeeze(dech), jnp.squeeze(ench)


if __name__ == "__main__":
    vdim, encdim, num_context, batch = 32, 32, 4, 8

    key = jax.random.PRNGKey(0)
    k_params, k_x, k_xl = jax.random.split(key, 3)
    params = init_params(k_params, vdim, encdim, num_context)
    target_vecs = jax.random.normal(k_x, (batch, 1, vdim), jnp.float32)
    doc_ids = jnp.arange(batch, dtype=jnp.int32)

    # ------------------ f32 path (tight check against reference) ------------------
    prep_f32 = prepare_params(params)
    dech_tr, ench_tr = table_cell_forward(target_vecs, doc_ids, prep_f32, train=True)
    dech_te, ench_te = table_cell_forward(target_vecs, doc_ids, prep_f32, train=False)
    jax.block_until_ready((dech_tr, ench_tr, dech_te, ench_te))

    ref_d_tr, ref_e_tr = _reference(target_vecs, params, True)
    ref_d_te, ref_e_te = _reference(target_vecs, params, False)
    assert dech_tr.shape == (batch, vdim * num_context)
    assert ench_tr.shape == (batch, encdim)
    assert jnp.allclose(dech_tr, ref_d_tr, atol=1e-4)
    assert jnp.allclose(ench_tr, ref_e_tr, atol=1e-4)
    assert jnp.allclose(dech_te, ref_d_te, atol=1e-4)
    assert jnp.allclose(ench_te, ref_e_te, atol=1e-4)

    # ------------------ larger batch: exercises the multi-step batch grid ---------
    big_b = 1100  # -> 2-step grid with a padded tail row block
    tv_big = jax.random.normal(k_xl, (big_b, 1, vdim), jnp.float32)
    dech_big, ench_big = table_cell_forward(
        tv_big, jnp.arange(big_b, dtype=jnp.int32), prep_f32, train=True)
    jax.block_until_ready((dech_big, ench_big))
    ref_d_big, ref_e_big = _reference(tv_big, params, True)
    assert dech_big.shape == (big_b, vdim * num_context)
    assert jnp.allclose(dech_big, ref_d_big, atol=1e-4)
    assert jnp.allclose(ench_big, ref_e_big, atol=1e-4)

    # ------------------ bf16 streaming path (looser tolerance) --------------------
    prep_bf16 = prepare_params(params, compute_dtype=jnp.bfloat16,
                               output_dtype=jnp.bfloat16)
    dech_bf, ench_bf = table_cell_forward(target_vecs, doc_ids, prep_bf16, train=True)
    jax.block_until_ready((dech_bf, ench_bf))
    assert jnp.allclose(dech_bf.astype(jnp.float32), ref_d_tr, atol=1e-1, rtol=1e-1)
    assert jnp.allclose(ench_bf.astype(jnp.float32), ref_e_tr, atol=1e-1, rtol=1e-1)

    print("KERNEL_OK")
</pallas_src>

<mosaic_0001>
module attributes {stable_mosaic.version = 11 : i64} {
  func.func @_cell_kernel(%arg0: i32, %arg1: memref<8x32xf32, #tpu.memory_space<vmem>>, %arg2: memref<32x32xf32, #tpu.memory_space<vmem>>, %arg3: memref<1x32xf32, #tpu.memory_space<vmem>>, %arg4: memref<32x128xf32, #tpu.memory_space<vmem>>, %arg5: memref<1x128xf32, #tpu.memory_space<vmem>>, %arg6: memref<8x32xf32, #tpu.memory_space<vmem>>, %arg7: memref<8x128xf32, #tpu.memory_space<vmem>>) attributes {dimension_semantics = [#tpu.dimension_semantics<parallel>], iteration_bounds = array<i64: 1>, scalar_prefetch = 0 : i64, scratch_operands = 0 : i64, tpu.core_type = #tpu.core_type<tc>, window_params = [{transform_indices = @transform_0, window_bounds = array<i64: 8, 32>}, {pipeline_mode = #tpu.pipeline_mode<synchronous>, transform_indices = @transform_1, window_bounds = array<i64: 32, 32>}, {pipeline_mode = #tpu.pipeline_mode<synchronous>, transform_indices = @transform_2, window_bounds = array<i64: 1, 32>}, {pipeline_mode = #tpu.pipeline_mode<synchronous>, transform_indices = @transform_3, window_bounds = array<i64: 32, 128>}, {pipeline_mode = #tpu.pipeline_mode<synchronous>, transform_indices = @transform_4, window_bounds = array<i64: 1, 128>}, {transform_indices = @transform_5, window_bounds = array<i64: 8, 32>}, {transform_indices = @transform_6, window_bounds = array<i64: 8, 128>}]} {
    %c0 = arith.constant 0 : index
    %c0_0 = arith.constant 0 : index
    %0 = vector.load %arg1[%c0, %c0_0] : memref<8x32xf32, #tpu.memory_space<vmem>>, vector<8x32xf32>
    %c0_1 = arith.constant 0 : index
    %c0_2 = arith.constant 0 : index
    %1 = vector.load %arg2[%c0_1, %c0_2] : memref<32x32xf32, #tpu.memory_space<vmem>>, vector<32x32xf32>
    %cst = arith.constant dense<0.000000e+00> : vector<8x32xf32>
    %2 = tpu.matmul %0, %1, %cst {dimension_numbers = #tpu.dot_dimension_numbers<[1], [0], [0], [1], [0, 0, 1, 1], [], []>} : vector<8x32xf32>, vector<32x32xf32>, vector<8x32xf32> -> vector<8x32xf32>
    %c0_3 = arith.constant 0 : index
    %c0_4 = arith.constant 0 : index
    %3 = vector.load %arg3[%c0_3, %c0_4] : memref<1x32xf32, #tpu.memory_space<vmem>>, vector<1x32xf32>
    %4 = vector.broadcast %3 : vector<1x32xf32> to vector<8x32xf32>
    %5 = arith.addf %2, %4 : vector<8x32xf32>
    %c0_5 = arith.constant 0 : index
    %c0_6 = arith.constant 0 : index
    %6 = vector.load %arg4[%c0_5, %c0_6] : memref<32x128xf32, #tpu.memory_space<vmem>>, vector<32x128xf32>
    %cst_7 = arith.constant dense<0.000000e+00> : vector<8x128xf32>
    %7 = tpu.matmul %0, %6, %cst_7 {dimension_numbers = #tpu.dot_dimension_numbers<[1], [0], [0], [1], [0, 0, 1, 1], [], []>} : vector<8x32xf32>, vector<32x128xf32>, vector<8x128xf32> -> vector<8x128xf32>
    %c0_8 = arith.constant 0 : index
    %c0_9 = arith.constant 0 : index
    %8 = vector.load %arg5[%c0_8, %c0_9] : memref<1x128xf32, #tpu.memory_space<vmem>>, vector<1x128xf32>
    %9 = vector.broadcast %8 : vector<1x128xf32> to vector<8x128xf32>
    %10 = arith.addf %7, %9 : vector<8x128xf32>
    %c0_10 = arith.constant 0 : index
    %c0_11 = arith.constant 0 : index
    %11 = vector.load %arg6[%c0_10, %c0_11] : memref<8x32xf32, #tpu.memory_space<vmem>>, vector<8x32xf32>
    tpu.vector_store %arg6[%c0_10, %c0_11], %5 {strides = array<i32>} : memref<8x32xf32, #tpu.memory_space<vmem>>, vector<8x32xf32>,
    %c0_12 = arith.constant 0 : index
    %c0_13 = arith.constant 0 : index
    %12 = vector.load %arg7[%c0_12, %c0_13] : memref<8x128xf32, #tpu.memory_space<vmem>>, vector<8x128xf32>
    tpu.vector_store %arg7[%c0_12, %c0_13], %10 {strides = array<i32>} : memref<8x128xf32, #tpu.memory_space<vmem>>, vector<8x128xf32>,
    return
  }
  func.func @transform_0(%arg0: i32) -> (i32, i32) {
    %c0_i32 = arith.constant 0 : i32
    %c0_i32_0 = arith.constant 0 : i32
    return %arg0, %c0_i32 : i32, i32
  }
  func.func @transform_1(%arg0: i32) -> (i32, i32) {
    %c0_i32 = arith.constant 0 : i32
    %c0_i32_0 = arith.constant 0 : i32
    %c0_i32_1 = arith.constant 0 : i32
    return %c0_i32, %c0_i32_0 : i32, i32
  }
  func.func @transform_2(%arg0: i32) -> (i32, i32) {
    %c0_i32 = arith.constant 0 : i32
    %c0_i32_0 = arith.constant 0 : i32
    %c0_i32_1 = arith.constant 0 : i32
    return %c0_i32, %c0_i32_0 : i32, i32
  }
  func.func @transform_3(%arg0: i32) -> (i32, i32) {
    %c0_i32 = arith.constant 0 : i32
    %c0_i32_0 = arith.constant 0 : i32
    %c0_i32_1 = arith.constant 0 : i32
    return %c0_i32, %c0_i32_0 : i32, i32
  }
  func.func @transform_4(%arg0: i32) -> (i32, i32) {
    %c0_i32 = arith.constant 0 : i32
    %c0_i32_0 = arith.constant 0 : i32
    %c0_i32_1 = arith.constant 0 : i32
    return %c0_i32, %c0_i32_0 : i32, i32
  }
  func.func @transform_5(%arg0: i32) -> (i32, i32) {
    %c0_i32 = arith.constant 0 : i32
    %c0_i32_0 = arith.constant 0 : i32
    return %arg0, %c0_i32 : i32, i32
  }
  func.func @transform_6(%arg0: i32) -> (i32, i32) {
    %c0_i32 = arith.constant 0 : i32
    %c0_i32_0 = arith.constant 0 : i32
    return %arg0, %c0_i32 : i32, i32
  }
}

</mosaic_0001>

<llo_original>
// kernel: tpu_custom_call.1
$region0: #{tpu_custom_call.1}
  #allocation0 [shape = 'u32[]', space=smem, size = 0x4, offset = 0x4, fixed_abs, tag = 'smem constant byte address 0x4 - core index']
  #allocation1 [shape = 'u32[72,128]{1,0:T(1,128)}', space=vmem, size = 0x9000, scoped, tag = 'internal scratch']
  %s0 = inlined_call_operand.hbm [shape: f32[8,32], index: 0, kind: input, shape index: {}]
  %s1 = inlined_call_operand.hbm [shape: f32[32,32], index: 1, kind: input, shape index: {}]
  %s2 = inlined_call_operand.vmem [shape: f32[1,32], index: 2, kind: input, shape index: {}]
  %s3 = inlined_call_operand.hbm [shape: f32[32,128], index: 3, kind: input, shape index: {}]
  %s4 = inlined_call_operand.vmem [shape: f32[1,128], index: 4, kind: input, shape index: {}]
  %s5 = inlined_call_operand.hbm [shape: f32[8,32], index: 5, kind: output, shape index: {0}]
  %s6 = inlined_call_operand.hbm [shape: f32[8,128], index: 6, kind: output, shape index: {1}]
  %7 = xla_tuple %s5, %s6
  %s8 = sld [smem:[#allocation0]]
  $region50: #{tpu_custom_call.1} parent=0
    _
  %s10 = ssub.s32 1, %s8
  %s11 = scalar_select 0, %s10, %s8
  $region1: #{tpu_custom_call.1} parent=0
    #allocation2 [shape = 'u8[4096]{0}', space=vmem, size = 0x1000, scoped, tag = 'input window, operand 0, single buffered']
    #allocation3 [shape = 's32[1]{0}', space=sflag, size = 0x4, scoped, tag = 'scoped memory for tpu_custom_call.1']
    #allocation4 [shape = 's32[1]{0}', space=sflag, size = 0x4, scoped, tag = 'scoped memory for tpu_custom_call.1']
    #allocation5 [shape = 'u8[16384]{0}', space=vmem, size = 0x4000, scoped, tag = 'input window, operand 1, single buffered']
    #allocation6 [shape = 's32[1]{0}', space=sflag, size = 0x4, scoped, tag = 'scoped memory for tpu_custom_call.1']
    #allocation7 [shape = 'u8[16384]{0}', space=vmem, size = 0x4000, scoped, tag = 'input window, operand 3, single buffered']
    #allocation8 [shape = 'u8[4096]{0}', space=vmem, size = 0x1000, scoped, tag = 'output window, operand 0, single buffered']
    #allocation9 [shape = 'u8[4096]{0}', space=vmem, size = 0x1000, scoped, tag = 'output window, operand 1, single buffered']
    #allocation10 [shape = 's32[1]{0}', space=sflag, size = 0x4, scoped, tag = 'scoped memory for tpu_custom_call.1']
    %12 = vsyncpa [#allocation3], 0
    %13 = vsyncpa [#allocation6], 0
    %14 = vsyncpa [#allocation4], 0
    %15 = vsyncpa [#allocation10], 0
    // Predicated region
    $region2: #{tpu_custom_call.1} parent=1 // pred_check
      _
    $region3: #{tpu_custom_call.1} parent=1 // pred_check_branch
      %17 = sbr.rel (0) target = $region5
    $region4: #{tpu_custom_call.1} parent=1 // pred_region
      %19 = vsyncadd [#allocation3], 0
      %s21 = sshll.u32 %s0, 4
      %s22 = int_to_ptr.hbm [resolvable:$true] %s21
      %s23 = sshll.u32 [#allocation2], 4
      %s24 = int_to_ptr.vmem [resolvable:$true] %s23
      %26 = dma.hbm_to_vmem [thread:$0]  %s22, 128, %s24, [#allocation3]
    $region5: #{tpu_custom_call.1} parent=1 // pred_fallthru
      _
    // Predicated region
    $region6: #{tpu_custom_call.1} parent=1 // pred_check
      _
    $region7: #{tpu_custom_call.1} parent=1 // pred_check_branch
      %28 = sbr.rel (0) target = $region9
    $region8: #{tpu_custom_call.1} parent=1 // pred_region
      %30 = vsyncadd [#allocation6], 0
      %s31 = sshll.u32 %s1, 4
      %s32 = int_to_ptr.hbm [resolvable:$true] %s31
      %s33 = sshll.u32 [#allocation5], 4
      %s34 = int_to_ptr.vmem [resolvable:$true] %s33
      %39 = dma.hbm_to_vmem [thread:$0]  %s32, 512, %s34, [#allocation6], 128, 128, 8
    $region9: #{tpu_custom_call.1} parent=1 // pred_fallthru
      _
    // Predicated region
    $region10: #{tpu_custom_call.1} parent=1 // pred_check
      _
    $region11: #{tpu_custom_call.1} parent=1 // pred_check_branch
      %41 = sbr.rel (0) target = $region13
    $region12: #{tpu_custom_call.1} parent=1 // pred_region
      _
    $region13: #{tpu_custom_call.1} parent=1 // pred_fallthru
      _
    // Predicated region
    $region14: #{tpu_custom_call.1} parent=1 // pred_check
      _
    $region15: #{tpu_custom_call.1} parent=1 // pred_check_branch
      %43 = sbr.rel (0) target = $region17
    $region16: #{tpu_custom_call.1} parent=1 // pred_region
      %45 = vsyncadd [#allocation6], 0
      %s46 = sshll.u32 %s3, 4
      %s47 = int_to_ptr.hbm [resolvable:$true] %s46
      %s48 = sshll.u32 [#allocation7], 4
      %s49 = int_to_ptr.vmem [resolvable:$true] %s48
      %54 = dma.hbm_to_vmem [thread:$0]  %s47, 512, %s49, [#allocation6], 128, 128, 8
    $region17: #{tpu_custom_call.1} parent=1 // pred_fallthru
      _
    // Predicated region
    $region18: #{tpu_custom_call.1} parent=1 // pred_check
      _
    $region19: #{tpu_custom_call.1} parent=1 // pred_check_branch
      %56 = sbr.rel (0) target = $region21
    $region20: #{tpu_custom_call.1} parent=1 // pred_region
      _
    $region21: #{tpu_custom_call.1} parent=1 // pred_fallthru
      _
    // Predicated region
    $region22: #{tpu_custom_call.1} parent=1 // pred_check
      _
    $region23: #{tpu_custom_call.1} parent=1 // pred_check_branch
      %58 = sbr.rel (0) target = $region25
    $region24: #{tpu_custom_call.1} parent=1 // pred_region
      %60 = dma.done [#allocation3], 128
    $region25: #{tpu_custom_call.1} parent=1 // pred_fallthru
      _
    // Predicated region
    $region26: #{tpu_custom_call.1} parent=1 // pred_check
      _
    $region27: #{tpu_custom_call.1} parent=1 // pred_check_branch
      %62 = sbr.rel (0) target = $region29
    $region28: #{tpu_custom_call.1} parent=1 // pred_region
      %64 = dma.done [#allocation6], 512
    $region29: #{tpu_custom_call.1} parent=1 // pred_fallthru
      _
    // Predicated region
    $region30: #{tpu_custom_call.1} parent=1 // pred_check
      _
    $region31: #{tpu_custom_call.1} parent=1 // pred_check_branch
      %66 = sbr.rel (0) target = $region33
    $region32: #{tpu_custom_call.1} parent=1 // pred_region
      %68 = dma.done [#allocation6], 512
    $region33: #{tpu_custom_call.1} parent=1 // pred_fallthru
      _
    %v69 = vld [vmem:[#allocation2] sm:$0xff]
    %v70 = vld [vmem:[#allocation5] sm:$0xff]
    %v71 = vld [vmem:[#allocation5 + $0x8] sm:$0xff]
    %v72 = vld [vmem:[#allocation5 + $0x10] sm:$0xff]
    %v73 = vld [vmem:[#allocation5 + $0x18] sm:$0xff]
    %v74 = vld [vmem:[%s2] sm:$0x1]
    %v76 = vperm.slane %v74, 0
    %vm78 = vcmask 261120
    %v80 = vsel %vm78, %v69, 0
    %82 = vmatpush.msra.mxu0 0.0
    %83 = vmatpush.msra.mxu0 0.0
    %84 = vmatpush.msra.mxu0 0.0
    %85 = vmatpush.msra.mxu0 0.0
    %86 = vmatpush.msra.mxu0 0.0
    %87 = vmatpush.msra.mxu0 0.0
    %88 = vmatpush.msra.mxu0 0.0
    %89 = vmatpush.msra.mxu0 0.0
    %90 = vmatpush.msra.mxu0 0.0
    %91 = vmatpush.msra.mxu0 0.0
    %92 = vmatpush.msra.mxu0 0.0
    %93 = vmatpush.msra.mxu0 0.0
    %94 = vmatpush.msra.mxu0 %v73
    %95 = vmatpush.msra.mxu0 %v72
    %96 = vmatpush.msra.mxu0 %v71
    %97 = vmatpush.msra.mxu0 %v70
    %98 = vmatmul.f32.gmra.mxu0 %v80
    %v99 = vpop.f32.mrf.mxu0
    %v100 = vadd.f32 %v76, %v99
    %101 = vdwg.mxu0
    %v102 = vld [vmem:[#allocation7] sm:$0xff]
    %v103 = vld [vmem:[#allocation7 + $0x8] sm:$0xff]
    %v104 = vld [vmem:[#allocation7 + $0x10] sm:$0xff]
    %v105 = vld [vmem:[#allocation7 + $0x18] sm:$0xff]
    %v106 = vld [vmem:[%s4] sm:$0x1]
    %v108 = vperm.slane %v106, 0
    %110 = vmatpush.msra.mxu0 0.0
    %111 = vmatpush.msra.mxu0 0.0
    %112 = vmatpush.msra.mxu0 0.0
    %113 = vmatpush.msra.mxu0 0.0
    %114 = vmatpush.msra.mxu0 0.0
    %115 = vmatpush.msra.mxu0 0.0
    %116 = vmatpush.msra.mxu0 0.0
    %117 = vmatpush.msra.mxu0 0.0
    %118 = vmatpush.msra.mxu0 0.0
    %119 = vmatpush.msra.mxu0 0.0
    %120 = vmatpush.msra.mxu0 0.0
    %121 = vmatpush.msra.mxu0 0.0
    %122 = vmatpush.msra.mxu0 %v105
    %123 = vmatpush.msra.mxu0 %v104
    %124 = vmatpush.msra.mxu0 %v103
    %125 = vmatpush.msra.mxu0 %v102
    %126 = vmatmul.f32.gmra.mxu0 %v80
    %v127 = vpop.f32.mrf.mxu0
    %v128 = vadd.f32 %v108, %v127
    %129 = vdwg.mxu0
    %130 = vst.msk [vmem:[#allocation8] sm:$0xff] %vm78, %v100
    %131 = vst [vmem:[#allocation9] sm:$0xff] %v128
    // Predicated region
    $region34: #{tpu_custom_call.1} parent=1 // pred_check
      _
    $region35: #{tpu_custom_call.1} parent=1 // pred_check_branch
      %133 = sbr.rel (0) target = $region37
    $region36: #{tpu_custom_call.1} parent=1 // pred_region
      %135 = vsyncadd [#allocation4], 0
      %s137 = sshll.u32 [#allocation8], 4
      %s138 = int_to_ptr.vmem [resolvable:$true] %s137
      %s139 = sshll.u32 %s5, 4
      %s140 = int_to_ptr.hbm [resolvable:$true] %s139
      %142 = dma.vmem_to_hbm [thread:$0]  %s138, 128, %s140, [#allocation4]
    $region37: #{tpu_custom_call.1} parent=1 // pred_fallthru
      _
    // Predicated region
    $region38: #{tpu_custom_call.1} parent=1 // pred_check
      _
    $region39: #{tpu_custom_call.1} parent=1 // pred_check_branch
      %144 = sbr.rel (0) target = $region41
    $region40: #{tpu_custom_call.1} parent=1 // pred_region
      %146 = vsyncadd [#allocation10], 0
      %s148 = sshll.u32 [#allocation9], 4
      %s149 = int_to_ptr.vmem [resolvable:$true] %s148
      %s150 = sshll.u32 %s6, 4
      %s151 = int_to_ptr.hbm [resolvable:$true] %s150
      %153 = dma.vmem_to_hbm [thread:$0]  %s149, 128, %s151, [#allocation10]
    $region41: #{tpu_custom_call.1} parent=1 // pred_fallthru
      _
    // Predicated region
    $region42: #{tpu_custom_call.1} parent=1 // pred_check
      _
    $region43: #{tpu_custom_call.1} parent=1 // pred_check_branch
      %155 = sbr.rel (0) target = $region45
    $region44: #{tpu_custom_call.1} parent=1 // pred_region
      %157 = dma.done [#allocation4], 128
    $region45: #{tpu_custom_call.1} parent=1 // pred_fallthru
      _
    // Predicated region
    $region46: #{tpu_custom_call.1} parent=1 // pred_check
      _
    $region47: #{tpu_custom_call.1} parent=1 // pred_check_branch
      %159 = sbr.rel (0) target = $region49
    $region48: #{tpu_custom_call.1} parent=1 // pred_region
      %161 = dma.done [#allocation10], 128
    $region49: #{tpu_custom_call.1} parent=1 // pred_fallthru
      _
    %162 = vsyncpa [#allocation3], 1
    %163 = vsyncpa [#allocation6], 1
    %164 = vsyncpa [#allocation4], 1
    %165 = vsyncpa [#allocation10], 1

</llo_original>
